<compile_context>
chip_gen: v5e
topology: v5e:2x2
jax: 0.10.0
libtpu: 0.0.40
codegen_flags: <defaults>
</compile_context>

<pallas_src>
import functools

import jax
import jax.numpy as jnp
from jax.experimental import pallas as pl
from jax.experimental.pallas import tpu as pltpu

MARGIN = 0.2
REDUCE = "mean"   # matches TripletLoss(margin=0.2, reduce='mean')

_LANES = 128
_SUBLANES = 8


# --------------------------------------------------------------------------
# Hardware detection (defensive: every query has a safe fallback).
# --------------------------------------------------------------------------
def _detect_generation():
    try:
        kind = jax.devices()[0].device_kind.lower()
    except Exception:
        return None
    for g in range(9, 1, -1):
        if ("v%d" % g) in kind or ("tpu%d" % g) in kind:
            return g
    return None


def _tpu_budgets():
    """Returns (generation, num_cores, vmem_limit_bytes, per-buffer block budget)."""
    gen = _detect_generation()
    vmem_cap = None
    cores = None
    try:
        info = pltpu.get_tpu_info()
        cap = getattr(info, "vmem_capacity_bytes", None)
        if isinstance(cap, int) and cap > 0:
            vmem_cap = cap
        for name in ("num_cores", "core_count", "cores_per_chip",
                     "num_tensorcores", "tensorcore_count"):
            v = getattr(info, name, None)
            if isinstance(v, int) and v > 0:
                cores = v
                break
    except Exception:
        pass
    if vmem_cap is None:
        # 128 MiB on <= v6; conservative 64 MiB (v7x-safe) when unknown.
        vmem_cap = (128 << 20) if (gen is not None and gen <= 6) else (64 << 20)
    if cores is None:
        cores = 2 if (gen is not None and gen >= 7) else 1
    vmem_limit = (vmem_cap * 3) // 4      # ~48 MiB on v7x, ~96 MiB on v5e/v6e
    block_budget = vmem_limit // 8        # 3 inputs x 2 pipeline buffers + slack
    return gen, cores, vmem_limit, block_budget


# --------------------------------------------------------------------------
# Kernels
# --------------------------------------------------------------------------
def _row_kernel(a_ref, p_ref, n_ref, out_ref, *, margin, rows_per_block,
                total_rows, steps_per_shard):
    """Blocks are (tb, D); out block is a resident (1, 8, 128) partial-sum vreg."""
    c = pl.program_id(0)          # shard (parallel)
    s = pl.program_id(1)          # step within shard (arbitrary / reduction)

    @pl.when(s == 0)
    def _init():
        out_ref[...] = jnp.zeros_like(out_ref)

    a = a_ref[...].astype(jnp.float32)
    p = p_ref[...].astype(jnp.float32)
    n = n_ref[...].astype(jnp.float32)

    # d_ap - d_an == sum((p - n) * (p + n - 2a), -1): one lane reduce, not two.
    dd = jnp.sum((p - n) * (p + n - 2.0 * a), axis=-1, keepdims=True)    # (tb, 1)
    loss = jnp.maximum(dd + margin, 0.0)

    # Select-based mask for tail rows / duplicated (clamped) blocks.
    blk = c * steps_per_shard + s
    row0 = blk * rows_per_block
    rid = row0 + jax.lax.broadcasted_iota(jnp.int32, (rows_per_block, 1), 0)
    loss = jnp.where(rid < total_rows, loss, 0.0)

    # Reduce this step's tile to one scalar and fold it into lane 0 of the
    # resident (1, 8, 128) accumulator: a single full-vreg RMW per step.
    part = jnp.sum(loss)
    sub = jax.lax.broadcasted_iota(jnp.int32, (_SUBLANES, _LANES), 0)
    lane = jax.lax.broadcasted_iota(jnp.int32, (_SUBLANES, _LANES), 1)
    out_ref[...] += jnp.where((sub == 0) & (lane == 0), part, 0.0)[None]


def _packed_kernel(seg_ref, a_ref, p_ref, n_ref, out_ref, *, margin,
                   rows_per_block, total_rows, steps_per_shard, group):
    """Lane-dense path for D < 128 (v6e/v7x): each 128-lane row packs `group` samples.

    seg_ref is a constant (128,128) matrix with seg[l, j] = (j == l // D) so the
    per-sample sums become one MXU matmul (hidden under the DMA on v6e/v7x).
    """
    c = pl.program_id(0)
    s = pl.program_id(1)

    @pl.when(s == 0)
    def _init():
        out_ref[...] = jnp.zeros_like(out_ref)

    a = a_ref[...].astype(jnp.float32)
    p = p_ref[...].astype(jnp.float32)
    n = n_ref[...].astype(jnp.float32)

    prod = (p - n) * (p + n - 2.0 * a)                                     # (tb, 128)
    seg = jnp.dot(prod, seg_ref[...], preferred_element_type=jnp.float32)  # (tb, 128)
    loss = jnp.maximum(seg + margin, 0.0)

    blk = c * steps_per_shard + s
    row0 = blk * rows_per_block
    rid = row0 + jax.lax.broadcasted_iota(jnp.int32, (rows_per_block, 1), 0)
    col = jax.lax.broadcasted_iota(jnp.int32, (1, _LANES), 1)
    loss = jnp.where((rid < total_rows) & (col < group), loss, 0.0)

    # Sublane-reduce to (1, 128), fold into row 0 of the resident accumulator.
    part = jnp.sum(loss, axis=0, keepdims=True)                            # (1, 128)
    sub = jax.lax.broadcasted_iota(jnp.int32, (_SUBLANES, _LANES), 0)
    out_ref[...] += jnp.where(sub == 0, part, 0.0)[None]


# --------------------------------------------------------------------------
# Wrapper
# --------------------------------------------------------------------------
def _pick_rows_per_block(n_rows, width, itemsize, max_block_bytes):
    """Biggest tile under the per-buffer budget, using the lane-PADDED footprint."""
    width_padded = ((width + _LANES - 1) // _LANES) * _LANES
    row_bytes = width_padded * itemsize
    tb = (max_block_bytes // max(row_bytes, 1)) // 32 * 32
    tb = max(tb, 32)          # multiple of 32: valid sublane tiling for f32/bf16/int8
    if tb >= n_rows:
        return n_rows         # full-extent block is always a legal block shape
    return tb


def triplet_loss(anchor, positive, negative, *, margin=MARGIN, reduce=REDUCE,
                 max_block_bytes=None):
    assert reduce in ("mean", "sum")
    assert anchor.shape == positive.shape == negative.shape
    assert anchor.ndim >= 2

    gen, num_cores, vmem_limit, block_budget = _tpu_budgets()
    if max_block_bytes is None:
        max_block_bytes = block_budget

    feat = int(anchor.shape[-1])
    batch = 1
    for d in anchor.shape[:-1]:
        batch *= int(d)

    a2 = anchor.reshape(batch, feat)
    p2 = positive.reshape(batch, feat)
    n2 = negative.reshape(batch, feat)
    itemsize = jnp.dtype(anchor.dtype).itemsize

    # Lane-dense packing when the feature dim is a small divisor of 128.
    # Gated to v6e/v7x: on v5e the f32 MXU matmul could become co-critical
    # with the HBM DMA, so v5e (and older / unknown-but-detected-old) chips
    # use the plain row path instead.
    mxu_ok = (gen is None) or (gen >= 6)
    packed = (mxu_ok and feat < _LANES and (_LANES % feat == 0)
              and (batch % (_LANES // feat) == 0))

    if packed:
        group = _LANES // feat
        rows, width = batch // group, _LANES
        a2 = a2.reshape(rows, width)          # free: contiguous row-major reshape
        p2 = p2.reshape(rows, width)
        n2 = n2.reshape(rows, width)
        lane = jax.lax.broadcasted_iota(jnp.int32, (_LANES, _LANES), 0)
        col = jax.lax.broadcasted_iota(jnp.int32, (_LANES, _LANES), 1)
        seg_mat = (col == lane // feat).astype(jnp.float32)
    else:
        rows, width = batch, feat

    tb = _pick_rows_per_block(rows, width, itemsize, max_block_bytes)
    nblk = pl.cdiv(rows, tb)
    shards = num_cores if (num_cores > 1 and nblk >= num_cores) else 1
    steps = pl.cdiv(nblk, shards)

    if shards * steps > nblk:
        def in_idx(c, s):
            # Clamp so padded (c, s) steps re-read the last block; rows masked.
            return (jnp.minimum(c * steps + s, nblk - 1), 0)
    else:
        def in_idx(c, s):
            return (c * steps + s, 0)

    data_spec = pl.BlockSpec((tb, width), in_idx)
    out_spec = pl.BlockSpec((1, _SUBLANES, _LANES), lambda c, s: (c, 0, 0))
    out_shape = jax.ShapeDtypeStruct((shards, _SUBLANES, _LANES), jnp.float32)

    flops = 6 * batch * feat + (2 * rows * _LANES * _LANES if packed else 0)
    cost = pl.CostEstimate(
        flops=flops,
        transcendentals=0,
        bytes_accessed=3 * batch * feat * itemsize + shards * _SUBLANES * _LANES * 4,
    )
    cparams = pltpu.CompilerParams(
        dimension_semantics=("parallel", "arbitrary"),
        vmem_limit_bytes=int(vmem_limit),
    )

    if packed:
        kernel = functools.partial(
            _packed_kernel, margin=float(margin), rows_per_block=tb,
            total_rows=rows, steps_per_shard=steps, group=group)
        in_specs = [pl.BlockSpec((_LANES, _LANES), lambda c, s: (0, 0)),
                    data_spec, data_spec, data_spec]
        args = (seg_mat, a2, p2, n2)
    else:
        kernel = functools.partial(
            _row_kernel, margin=float(margin), rows_per_block=tb,
            total_rows=rows, steps_per_shard=steps)
        in_specs = [data_spec, data_spec, data_spec]
        args = (a2, p2, n2)

    partials = pl.pallas_call(
        kernel,
        out_shape=out_shape,
        grid_spec=pltpu.PrefetchScalarGridSpec(
            num_scalar_prefetch=0,
            grid=(shards, steps),
            in_specs=in_specs,
            out_specs=out_spec,
        ),
        compiler_params=cparams,
        cost_estimate=cost,
    )(*args)

    total = jnp.sum(partials)                 # tiny (shards*8*128) reduce in XLA
    if reduce == "mean":
        total = total / jnp.float32(batch)
    return total


def _reference(anchor, positive, negative, margin=MARGIN, reduce=REDUCE):
    a = anchor.astype(jnp.float32)
    p = positive.astype(jnp.float32)
    n = negative.astype(jnp.float32)
    d_ap = jnp.sum((a - p) ** 2, axis=-1)
    d_an = jnp.sum((a - n) ** 2, axis=-1)
    loss = jnp.maximum(d_ap - d_an + margin, 0.0)
    return jnp.mean(loss) if reduce == "mean" else jnp.sum(loss)


if __name__ == "__main__":
    key = jax.random.PRNGKey(0)

    cases = [
        dict(shape=(16, 32), dtype=jnp.float32, blk=None),    # lane-packed path (D=32) on v6e/v7x
        dict(shape=(8, 256), dtype=jnp.float32, blk=None),    # row path, D % 128 == 0
        dict(shape=(16, 32), dtype=jnp.bfloat16, blk=None),   # bf16 inputs (half the HBM bytes)
        dict(shape=(90, 96), dtype=jnp.float32, blk=8192),    # multi-block row path + tail mask
        dict(shape=(260, 32), dtype=jnp.float32, blk=8192),   # multi-block (packed or row) + tail mask
        dict(shape=(2, 5, 64), dtype=jnp.float32, blk=None),  # >2-D inputs (flattened batch)
    ]

    for i, cs in enumerate(cases):
        key, ka, kp, kn = jax.random.split(key, 4)
        a = jax.random.normal(ka, cs["shape"], dtype=jnp.float32).astype(cs["dtype"])
        p = jax.random.normal(kp, cs["shape"], dtype=jnp.float32).astype(cs["dtype"])
        n = jax.random.normal(kn, cs["shape"], dtype=jnp.float32).astype(cs["dtype"])

        out = triplet_loss(a, p, n, max_block_bytes=cs["blk"])
        out = jax.block_until_ready(out)
        ref = _reference(a, p, n)
        assert jnp.allclose(out, ref, rtol=1e-4, atol=1e-4), (i, out, ref)

    print("KERNEL_OK")
</pallas_src>

<mosaic_0001>
module attributes {stable_mosaic.version = 11 : i64} {
  func.func @_packed_kernel(%arg0: i32, %arg1: i32, %arg2: memref<128x128xf32, #tpu.memory_space<vmem>>, %arg3: memref<4x128xf32, #tpu.memory_space<vmem>>, %arg4: memref<4x128xf32, #tpu.memory_space<vmem>>, %arg5: memref<4x128xf32, #tpu.memory_space<vmem>>, %arg6: memref<1x8x128xf32, #tpu.memory_space<vmem>>) attributes {dimension_semantics = [#tpu.dimension_semantics<parallel>, #tpu.dimension_semantics<arbitrary>], iteration_bounds = array<i64: 1, 1>, scalar_prefetch = 0 : i64, scratch_operands = 0 : i64, tpu.core_type = #tpu.core_type<tc>, window_params = [{pipeline_mode = #tpu.pipeline_mode<synchronous>, transform_indices = @transform_0, window_bounds = array<i64: 128, 128>}, {transform_indices = @transform_1, window_bounds = array<i64: 4, 128>}, {transform_indices = @transform_2, window_bounds = array<i64: 4, 128>}, {transform_indices = @transform_3, window_bounds = array<i64: 4, 128>}, {transform_indices = @transform_4, window_bounds = array<i64: 1, 8, 128>}]} {
    %c0_i32 = arith.constant 0 : i32
    %0 = arith.cmpi eq, %arg1, %c0_i32 : i32
    %1 = arith.extui %0 : i1 to i32
    %c0_i32_0 = arith.constant 0 : i32
    %2 = arith.cmpi ne, %1, %c0_i32_0 : i32
    scf.if %2 {
      %cst_23 = arith.constant 0.000000e+00 : f32
      %47 = vector.broadcast %cst_23 : f32 to vector<1x8x128xf32>
      %c0_24 = arith.constant 0 : index
      %c0_25 = arith.constant 0 : index
      %c0_26 = arith.constant 0 : index
      %48 = vector.load %arg6[%c0_24, %c0_25, %c0_26] : memref<1x8x128xf32, #tpu.memory_space<vmem>>, vector<1x8x128xf32>
      tpu.vector_store %arg6[%c0_24, %c0_25, %c0_26], %47 {strides = array<i32>} : memref<1x8x128xf32, #tpu.memory_space<vmem>>, vector<1x8x128xf32>,
    } else {
    }
    %c0 = arith.constant 0 : index
    %c0_1 = arith.constant 0 : index
    %3 = vector.load %arg3[%c0, %c0_1] : memref<4x128xf32, #tpu.memory_space<vmem>>, vector<4x128xf32>
    %c0_2 = arith.constant 0 : index
    %c0_3 = arith.constant 0 : index
    %4 = vector.load %arg4[%c0_2, %c0_3] : memref<4x128xf32, #tpu.memory_space<vmem>>, vector<4x128xf32>
    %c0_4 = arith.constant 0 : index
    %c0_5 = arith.constant 0 : index
    %5 = vector.load %arg5[%c0_4, %c0_5] : memref<4x128xf32, #tpu.memory_space<vmem>>, vector<4x128xf32>
    %6 = arith.subf %4, %5 : vector<4x128xf32>
    %7 = arith.addf %4, %5 : vector<4x128xf32>
    %cst = arith.constant 2.000000e+00 : f32
    %8 = vector.broadcast %cst : f32 to vector<4x128xf32>
    %9 = arith.mulf %8, %3 : vector<4x128xf32>
    %10 = arith.subf %7, %9 : vector<4x128xf32>
    %11 = arith.mulf %6, %10 : vector<4x128xf32>
    %c0_6 = arith.constant 0 : index
    %c0_7 = arith.constant 0 : index
    %12 = vector.load %arg2[%c0_6, %c0_7] : memref<128x128xf32, #tpu.memory_space<vmem>>, vector<128x128xf32>
    %cst_8 = arith.constant dense<0.000000e+00> : vector<4x128xf32>
    %13 = tpu.matmul %11, %12, %cst_8 {dimension_numbers = #tpu.dot_dimension_numbers<[1], [0], [0], [1], [0, 0, 1, 1], [], []>} : vector<4x128xf32>, vector<128x128xf32>, vector<4x128xf32> -> vector<4x128xf32>
    %cst_9 = arith.constant 2.000000e-01 : f32
    %14 = vector.broadcast %cst_9 : f32 to vector<4x128xf32>
    %15 = arith.addf %13, %14 : vector<4x128xf32>
    %cst_10 = arith.constant 0.000000e+00 : f32
    %16 = vector.broadcast %cst_10 : f32 to vector<4x128xf32>
    %17 = arith.maximumf %15, %16 : vector<4x128xf32>
    %c1_i32 = arith.constant 1 : i32
    %18 = arith.muli %arg0, %c1_i32 : i32
    %19 = arith.addi %18, %arg1 : i32
    %c4_i32 = arith.constant 4 : i32
    %20 = arith.muli %19, %c4_i32 : i32
    %21 = tpu.iota {dimensions = array<i32: 0>} : vector<4x1xi32>
    %22 = vector.broadcast %20 : i32 to vector<4x1xi32>
    %23 = arith.addi %22, %21 : vector<4x1xi32>
    %24 = tpu.iota {dimensions = array<i32: 1>} : vector<1x128xi32>
    %c4_i32_11 = arith.constant 4 : i32
    %25 = vector.broadcast %c4_i32_11 : i32 to vector<4x1xi32>
    %26 = arith.cmpi slt, %23, %25 : vector<4x1xi32>
    %c4_i32_12 = arith.constant 4 : i32
    %27 = vector.broadcast %c4_i32_12 : i32 to vector<1x128xi32>
    %28 = arith.cmpi slt, %24, %27 : vector<1x128xi32>
    %29 = vector.broadcast %26 : vector<4x1xi1> to vector<4x128xi1>
    %30 = vector.broadcast %28 : vector<1x128xi1> to vector<4x128xi1>
    %31 = arith.andi %29, %30 : vector<4x128xi1>
    %cst_13 = arith.constant 0.000000e+00 : f32
    %32 = vector.broadcast %cst_13 : f32 to vector<4x128xf32>
    %33 = arith.select %31, %17, %32 : vector<4x128xi1>, vector<4x128xf32>
    %cst_14 = arith.constant dense<0.000000e+00> : vector<128xf32>
    %34 = vector.multi_reduction <add>, %33, %cst_14 [0] : vector<4x128xf32> to vector<128xf32>
    %35 = vector.shape_cast %34 : vector<128xf32> to vector<1x128xf32>
    %36 = tpu.iota {dimensions = array<i32: 0>} : vector<8x128xi32>
    %c0_15 = arith.constant 0 : index
    %c0_16 = arith.constant 0 : index
    %c0_17 = arith.constant 0 : index
    %37 = vector.load %arg6[%c0_15, %c0_16, %c0_17] : memref<1x8x128xf32, #tpu.memory_space<vmem>>, vector<1x8x128xf32>
    %c0_i32_18 = arith.constant 0 : i32
    %38 = vector.broadcast %c0_i32_18 : i32 to vector<8x128xi32>
    %39 = arith.cmpi eq, %36, %38 : vector<8x128xi32>
    %cst_19 = arith.constant 0.000000e+00 : f32
    %40 = vector.shape_cast %35 : vector<1x128xf32> to vector<1x128xf32>
    %41 = vector.broadcast %40 : vector<1x128xf32> to vector<8x128xf32>
    %42 = vector.broadcast %cst_19 : f32 to vector<8x128xf32>
    %43 = arith.select %39, %41, %42 : vector<8x128xi1>, vector<8x128xf32>
    %44 = vector.shape_cast %43 : vector<8x128xf32> to vector<1x8x128xf32>
    %45 = arith.addf %37, %44 : vector<1x8x128xf32>
    %c0_20 = arith.constant 0 : index
    %c0_21 = arith.constant 0 : index
    %c0_22 = arith.constant 0 : index
    %46 = vector.load %arg6[%c0_20, %c0_21, %c0_22] : memref<1x8x128xf32, #tpu.memory_space<vmem>>, vector<1x8x128xf32>
    tpu.vector_store %arg6[%c0_20, %c0_21, %c0_22], %45 {strides = array<i32>} : memref<1x8x128xf32, #tpu.memory_space<vmem>>, vector<1x8x128xf32>,
    return
  }
  func.func @transform_0(%arg0: i32, %arg1: i32) -> (i32, i32) {
    %c0_i32 = arith.constant 0 : i32
    %c0_i32_0 = arith.constant 0 : i32
    %c0_i32_1 = arith.constant 0 : i32
    return %c0_i32, %c0_i32_0 : i32, i32
  }
  func.func @transform_1(%arg0: i32, %arg1: i32) -> (i32, i32) {
    %c1_i32 = arith.constant 1 : i32
    %0 = arith.muli %arg0, %c1_i32 : i32
    %1 = arith.addi %0, %arg1 : i32
    %c0_i32 = arith.constant 0 : i32
    %c0_i32_0 = arith.constant 0 : i32
    return %1, %c0_i32 : i32, i32
  }
  func.func @transform_2(%arg0: i32, %arg1: i32) -> (i32, i32) {
    %c1_i32 = arith.constant 1 : i32
    %0 = arith.muli %arg0, %c1_i32 : i32
    %1 = arith.addi %0, %arg1 : i32
    %c0_i32 = arith.constant 0 : i32
    %c0_i32_0 = arith.constant 0 : i32
    return %1, %c0_i32 : i32, i32
  }
  func.func @transform_3(%arg0: i32, %arg1: i32) -> (i32, i32) {
    %c1_i32 = arith.constant 1 : i32
    %0 = arith.muli %arg0, %c1_i32 : i32
    %1 = arith.addi %0, %arg1 : i32
    %c0_i32 = arith.constant 0 : i32
    %c0_i32_0 = arith.constant 0 : i32
    return %1, %c0_i32 : i32, i32
  }
  func.func @transform_4(%arg0: i32, %arg1: i32) -> (i32, i32, i32) {
    %c0_i32 = arith.constant 0 : i32
    %c0_i32_0 = arith.constant 0 : i32
    %c0_i32_1 = arith.constant 0 : i32
    return %arg0, %c0_i32, %c0_i32_0 : i32, i32, i32
  }
}

</mosaic_0001>

<llo_original>
// kernel: tpu_custom_call.1
$region0: #{tpu_custom_call.1}
  #allocation0 [shape = 'u32[]', space=smem, size = 0x4, offset = 0x4, fixed_abs, tag = 'smem constant byte address 0x4 - core index']
  #allocation1 [shape = 'u32[72,128]{1,0:T(1,128)}', space=vmem, size = 0x9000, scoped, tag = 'internal scratch']
  %s0 = inlined_call_operand.hbm [shape: f32[128,128], index: 0, kind: input, shape index: {}]
  %s1 = inlined_call_operand.hbm [shape: f32[4,128], index: 1, kind: input, shape index: {}]
  %s2 = inlined_call_operand.hbm [shape: f32[4,128], index: 2, kind: input, shape index: {}]
  %s3 = inlined_call_operand.hbm [shape: f32[4,128], index: 3, kind: input, shape index: {}]
  %s4 = inlined_call_operand.hbm [shape: f32[1,8,128], index: 4, kind: output, shape index: {}]
  %s5 = sld [smem:[#allocation0]]
  $region46: #{tpu_custom_call.1} parent=0
    _
  %s7 = ssub.s32 1, %s5
  %s8 = scalar_select 0, %s7, %s5
  $region1: #{tpu_custom_call.1} parent=0
    #allocation2 [shape = 'u8[65536]{0}', space=vmem, size = 0x10000, scoped, tag = 'input window, operand 0, single buffered']
    #allocation3 [shape = 's32[1]{0}', space=sflag, size = 0x4, scoped, tag = 'scoped memory for tpu_custom_call.1']
    #allocation4 [shape = 's32[1]{0}', space=sflag, size = 0x4, scoped, tag = 'scoped memory for tpu_custom_call.1']
    #allocation5 [shape = 'u8[2048]{0}', space=vmem, size = 0x800, scoped, tag = 'input window, operand 1, single buffered']
    #allocation6 [shape = 's32[1]{0}', space=sflag, size = 0x4, scoped, tag = 'scoped memory for tpu_custom_call.1']
    #allocation7 [shape = 'u8[2048]{0}', space=vmem, size = 0x800, scoped, tag = 'input window, operand 2, single buffered']
    #allocation8 [shape = 'u8[2048]{0}', space=vmem, size = 0x800, scoped, tag = 'input window, operand 3, single buffered']
    #allocation9 [shape = 's32[1]{0}', space=sflag, size = 0x4, scoped, tag = 'scoped memory for tpu_custom_call.1']
    #allocation10 [shape = 'u8[4096]{0}', space=vmem, size = 0x1000, scoped, tag = 'output window, operand 0, single buffered']
    %9 = vsyncpa [#allocation3], 0
    %10 = vsyncpa [#allocation6], 0
    %11 = vsyncpa [#allocation9], 0
    %12 = vsyncpa [#allocation4], 0
    // Predicated region
    $region2: #{tpu_custom_call.1} parent=1 // pred_check
      _
    $region3: #{tpu_custom_call.1} parent=1 // pred_check_branch
      %14 = sbr.rel (0) target = $region5
    $region4: #{tpu_custom_call.1} parent=1 // pred_region
      %16 = vsyncadd [#allocation3], 0
      %s17 = sshll.u32 %s0, 4
      %s18 = int_to_ptr.hbm [resolvable:$true] %s17
      %s19 = sshll.u32 [#allocation2], 4
      %s20 = int_to_ptr.vmem [resolvable:$true] %s19
      %25 = dma.hbm_to_vmem [thread:$0]  %s18, 2048, %s20, [#allocation3], 128, 128, 8
    $region5: #{tpu_custom_call.1} parent=1 // pred_fallthru
      _
    // Predicated region
    $region6: #{tpu_custom_call.1} parent=1 // pred_check
      _
    $region7: #{tpu_custom_call.1} parent=1 // pred_check_branch
      %27 = sbr.rel (0) target = $region9
    $region8: #{tpu_custom_call.1} parent=1 // pred_region
      %s28 = sadd.s32 0, 0
      %30 = vsyncadd [#allocation6], 0
      %s31 = smul.addr %s28, 4
      %s32 = scalar_lea.hbm %s1, %s31
      %s34 = sshll.u32 %s32, 4
      %s35 = int_to_ptr.hbm [resolvable:$true] %s34
      %s36 = sshll.u32 [#allocation5], 4
      %s37 = int_to_ptr.vmem [resolvable:$true] %s36
      %39 = dma.hbm_to_vmem [thread:$0]  %s35, 64, %s37, [#allocation6]
    $region9: #{tpu_custom_call.1} parent=1 // pred_fallthru
      _
    // Predicated region
    $region10: #{tpu_custom_call.1} parent=1 // pred_check
      _
    $region11: #{tpu_custom_call.1} parent=1 // pred_check_branch
      %41 = sbr.rel (0) target = $region13
    $region12: #{tpu_custom_call.1} parent=1 // pred_region
      %s42 = sadd.s32 0, 0
      %44 = vsyncadd [#allocation6], 0
      %s45 = smul.addr %s42, 4
      %s46 = scalar_lea.hbm %s2, %s45
      %s48 = sshll.u32 %s46, 4
      %s49 = int_to_ptr.hbm [resolvable:$true] %s48
      %s50 = sshll.u32 [#allocation7], 4
      %s51 = int_to_ptr.vmem [resolvable:$true] %s50
      %53 = dma.hbm_to_vmem [thread:$0]  %s49, 64, %s51, [#allocation6]
    $region13: #{tpu_custom_call.1} parent=1 // pred_fallthru
      _
    // Predicated region
    $region14: #{tpu_custom_call.1} parent=1 // pred_check
      _
    $region15: #{tpu_custom_call.1} parent=1 // pred_check_branch
      %55 = sbr.rel (0) target = $region17
    $region16: #{tpu_custom_call.1} parent=1 // pred_region
      %s56 = sadd.s32 0, 0
      %58 = vsyncadd [#allocation9], 0
      %s59 = smul.addr %s56, 4
      %s60 = scalar_lea.hbm %s3, %s59
      %s62 = sshll.u32 %s60, 4
      %s63 = int_to_ptr.hbm [resolvable:$true] %s62
      %s64 = sshll.u32 [#allocation8], 4
      %s65 = int_to_ptr.vmem [resolvable:$true] %s64
      %67 = dma.hbm_to_vmem [thread:$0]  %s63, 64, %s65, [#allocation9]
    $region17: #{tpu_custom_call.1} parent=1 // pred_fallthru
      _
    // Predicated region
    $region18: #{tpu_custom_call.1} parent=1 // pred_check
      _
    $region19: #{tpu_custom_call.1} parent=1 // pred_check_branch
      %69 = sbr.rel (0) target = $region21
    $region20: #{tpu_custom_call.1} parent=1 // pred_region
      %71 = dma.done [#allocation3], 2048
    $region21: #{tpu_custom_call.1} parent=1 // pred_fallthru
      _
    // Predicated region
    $region22: #{tpu_custom_call.1} parent=1 // pred_check
      _
    $region23: #{tpu_custom_call.1} parent=1 // pred_check_branch
      %73 = sbr.rel (0) target = $region25
    $region24: #{tpu_custom_call.1} parent=1 // pred_region
      %75 = dma.done [#allocation6], 64
    $region25: #{tpu_custom_call.1} parent=1 // pred_fallthru
      _
    // Predicated region
    $region26: #{tpu_custom_call.1} parent=1 // pred_check
      _
    $region27: #{tpu_custom_call.1} parent=1 // pred_check_branch
      %77 = sbr.rel (0) target = $region29
    $region28: #{tpu_custom_call.1} parent=1 // pred_region
      %79 = dma.done [#allocation6], 64
    $region29: #{tpu_custom_call.1} parent=1 // pred_fallthru
      _
    // Predicated region
    $region30: #{tpu_custom_call.1} parent=1 // pred_check
      _
    $region31: #{tpu_custom_call.1} parent=1 // pred_check_branch
      %81 = sbr.rel (0) target = $region33
    $region32: #{tpu_custom_call.1} parent=1 // pred_region
      %83 = dma.done [#allocation9], 64
    $region33: #{tpu_custom_call.1} parent=1 // pred_fallthru
      _
    %s84 = sadd.s32 0, 0
    %s85 = sadd.s32 0, 0
    %s86 = sadd.s32 0, 0
    %p87 = scmp.eq.s32.totalorder 0, 0
    // Predicated region
    $region34: #{tpu_custom_call.1} parent=1 // pred_check
      %p88 = pneg %p87
    $region35: #{tpu_custom_call.1} parent=1 // pred_check_branch
      %90 = sbr.rel (%p88) target = $region37
    $region36: #{tpu_custom_call.1} parent=1 // pred_region
      %91 = vst [vmem:[#allocation10] sm:$0xff] 0.0
    $region37: #{tpu_custom_call.1} parent=1 // pred_fallthru
      _
    %v92 = vld [vmem:[#allocation5] sm:$0xf]
    %v93 = vld [vmem:[#allocation7] sm:$0xf]
    %v94 = vld [vmem:[#allocation8] sm:$0xf]
    %v95 = vsub.f32 %v93, %v94
    %v96 = vadd.f32 %v93, %v94
    %v97 = vmul.f32 %v92, 2.0
    %v98 = vsub.f32 %v96, %v97
    %v99 = vmul.f32 %v95, %v98
    %v100 = vld [vmem:[#allocation2] sm:$0xff]
    %v101 = vld [vmem:[#allocation2 + $0x8] sm:$0xff]
    %v102 = vld [vmem:[#allocation2 + $0x10] sm:$0xff]
    %v103 = vld [vmem:[#allocation2 + $0x18] sm:$0xff]
    %v104 = vld [vmem:[#allocation2 + $0x20] sm:$0xff]
    %v105 = vld [vmem:[#allocation2 + $0x28] sm:$0xff]
    %v106 = vld [vmem:[#allocation2 + $0x30] sm:$0xff]
    %v107 = vld [vmem:[#allocation2 + $0x38] sm:$0xff]
    %v108 = vld [vmem:[#allocation2 + $0x40] sm:$0xff]
    %v109 = vld [vmem:[#allocation2 + $0x48] sm:$0xff]
    %v110 = vld [vmem:[#allocation2 + $0x50] sm:$0xff]
    %v111 = vld [vmem:[#allocation2 + $0x58] sm:$0xff]
    %v112 = vld [vmem:[#allocation2 + $0x60] sm:$0xff]
    %v113 = vld [vmem:[#allocation2 + $0x68] sm:$0xff]
    %v114 = vld [vmem:[#allocation2 + $0x70] sm:$0xff]
    %v115 = vld [vmem:[#allocation2 + $0x78] sm:$0xff]
    %116 = vmatpush.msra.mxu0 %v115
    %117 = vmatpush.msra.mxu0 %v114
    %118 = vmatpush.msra.mxu0 %v113
    %119 = vmatpush.msra.mxu0 %v112
    %120 = vmatpush.msra.mxu0 %v111
    %121 = vmatpush.msra.mxu0 %v110
    %122 = vmatpush.msra.mxu0 %v109
    %123 = vmatpush.msra.mxu0 %v108
    %124 = vmatpush.msra.mxu0 %v107
    %125 = vmatpush.msra.mxu0 %v106
    %126 = vmatpush.msra.mxu0 %v105
    %127 = vmatpush.msra.mxu0 %v104
    %128 = vmatpush.msra.mxu0 %v103
    %129 = vmatpush.msra.mxu0 %v102
    %130 = vmatpush.msra.mxu0 %v101
    %131 = vmatpush.msra.mxu0 %v100
    %132 = vmatmul.f32.gmra.mxu0 %v99
    %v133 = vpop.f32.mrf.mxu0
    %v134 = vadd.f32 0.2, %v133
    %135 = vdwg.mxu0
    %v136 = vmax.f32 %v134, 0.0
    %s137 = sadd.s32 0, 0
    %s138 = smul.u32 %s137, 4
    %v139 = vlaneseq
    %v140 = vshrl.u32 %v139, 7
    %v141 = vstv %s138
    %v142 = vadd.s32 %v141, %v140
    %v143 = vlaneseq
    %v144 = vand.u32 %v143, 127
    %vm145 = vcmp.lt.s32.totalorder %v142, 4
    %vm146 = vcmp.lt.s32.totalorder %v144, 4
    %v147 = vsel %vm145, 1, 0
    %vm148 = vcmp.eq.s32.totalorder %v147, 1
    %v149 = vsel %vm146, 1, 0
    %vm150 = vcmp.eq.s32.totalorder %v149, 1
    %vm151 = vmand %vm148, %vm150
    %v152 = vsel %vm151, %v136, 0.0
    %vm153 = vcmask 1043456
    %v154 = vsel %vm153, %v152, 0.0
    %v155 = vrot.slane %v154, 4
    %v156 = vadd.f32 %v154, %v155
    %v157 = vrot.slane %v156, 2
    %v158 = vadd.f32 %v156, %v157
    %v159 = vrot.slane %v158, 1
    %v160 = vadd.f32 %v158, %v159
    %v161 = vld [vmem:[#allocation10] sm:$0xff]
    %vm162 = vcmp.eq.s32.totalorder %v140, 0
    %v163 = vsel %vm162, %v160, 0.0
    %v164 = vadd.f32 %v161, %v163
    %165 = vst [vmem:[#allocation10] sm:$0xff] %v164
    // Predicated region
    $region38: #{tpu_custom_call.1} parent=1 // pred_check
      _
    $region39: #{tpu_custom_call.1} parent=1 // pred_check_branch
      %167 = sbr.rel (0) target = $region41
    $region40: #{tpu_custom_call.1} parent=1 // pred_region
      %169 = vsyncadd [#allocation4], 0
      %s171 = sshll.u32 [#allocation10], 4
      %s172 = int_to_ptr.vmem [resolvable:$true] %s171
      %s173 = sshll.u32 %s4, 4
      %s174 = int_to_ptr.hbm [resolvable:$true] %s173
      %176 = dma.vmem_to_hbm [thread:$0]  %s172, 128, %s174, [#allocation4]
    $region41: #{tpu_custom_call.1} parent=1 // pred_fallthru
      _
    // Predicated region
    $region42: #{tpu_custom_call.1} parent=1 // pred_check
      _
    $region43: #{tpu_custom_call.1} parent=1 // pred_check_branch
      %178 = sbr.rel (0) target = $region45
    $region44: #{tpu_custom_call.1} parent=1 // pred_region
      %180 = dma.done [#allocation4], 128
    $region45: #{tpu_custom_call.1} parent=1 // pred_fallthru
      _
    %181 = vsyncpa [#allocation3], 1
    %182 = vsyncpa [#allocation6], 1
    %183 = vsyncpa [#allocation9], 1
    %184 = vsyncpa [#allocation4], 1

</llo_original>
